<compile_context>
chip_gen: v7x
topology: tpu7x:2x2x1
jax: 0.10.0
libtpu: 0.0.40
codegen_flags: <defaults>
</compile_context>

<pallas_src>
import jax
import jax.numpy as jnp
from jax import lax
from jax.experimental import pallas as pl
from jax.experimental.pallas import tpu as pltpu

# --- small, module-consistent shapes -----------------------------------------
B = 2                 # batch
S = 8                 # sequence length
H = 32                # hidden_size (768 in the original, scaled down)
FILTERS = 8           # filters (50 in the original, scaled down)
FILTER_SIZES = (2, 3, 4, 5)
NUM_CLASSES = 2
VOCAB = 100

KMAX = max(FILTER_SIZES)          # 5 conv taps
L_PAD = S                         # padded sliding-window positions per batch (8, sublane aligned)
ROWS = B * L_PAD                  # 16 score rows == B*S encoder rows
F4 = len(FILTER_SIZES) * FILTERS  # 32 concatenated conv features
F4PAD = 128                       # lane-padded feature width
OUT_PAD = 128                     # lane-padded logits width (sliced back to 2)
NEG = -1e30                       # additive mask for invalid conv positions

assert S % 8 == 0 and L_PAD == S
assert max(FILTER_SIZES) <= S          # every filter size has >= 1 valid position
assert FILTER_SIZES == tuple(range(FILTER_SIZES[0], FILTER_SIZES[0] + len(FILTER_SIZES)))

_FLOPS = 2 * KMAX * ROWS * H * F4PAD + 2 * B * F4 * OUT_PAD
_BYTES = ROWS * H * 4 + KMAX * H * F4PAD * 2 + F4 * OUT_PAD * 2 + 8 * F4PAD * 4 + B * OUT_PAD * 4


def _bert_cnn_head_kernel(x_ref, wconv_ref, fc_ref, aux_ref, o_ref):
    """Fused TextCNN head: per-tap conv matmuls -> relu -> masked maxpool -> fc."""
    x = x_ref[...]                                        # (ROWS, H) f32

    # All four filter sizes at once: tap j contributes x[l+j] @ W_tap_j, where
    # W_tap_j rows live at [j*H:(j+1)*H] of the packed slab (zero for taps past
    # a filter's own size).  Row shifts done with static sublane concat; the
    # j trailing rows are don't-care (they only feed masked positions).
    acc = jnp.zeros((ROWS, F4PAD), jnp.float32)
    for j in range(KMAX):
        if j == 0:
            xj = x
        else:
            xj = jnp.concatenate([x[j:, :], jnp.zeros((j, H), x.dtype)], axis=0)
        acc = acc + jnp.dot(xj.astype(jnp.bfloat16),
                            wconv_ref[j * H:(j + 1) * H, :],
                            preferred_element_type=jnp.float32)

    scores = jnp.maximum(acc + aux_ref[0:1, :], 0.0)      # conv bias + ReLU (f32)

    # Mask positions past each filter size's valid range, then max-pool over
    # time with a tile-aligned reshape (ROWS = B * L_PAD, L_PAD == 8).
    s3 = scores.reshape(B, L_PAD, F4PAD)
    pos = lax.broadcasted_iota(jnp.int32, (B, L_PAD, F4PAD), 1)
    col = lax.broadcasted_iota(jnp.int32, (B, L_PAD, F4PAD), 2)
    limit = jnp.full((B, L_PAD, F4PAD), L_PAD, jnp.int32)  # padded cols: always valid (value 0)
    for i, k in enumerate(FILTER_SIZES):
        in_band = (col >= i * FILTERS) & (col < (i + 1) * FILTERS)
        limit = jnp.where(in_band, S - k, limit)
    feat = jnp.max(jnp.where(pos <= limit, s3, NEG), axis=1)   # (B, F4PAD) f32

    # Final Linear(4*filters -> 2) + bias.
    out = jnp.dot(feat[:, :F4].astype(jnp.bfloat16), fc_ref[...],
                  preferred_element_type=jnp.float32)           # (B, OUT_PAD)
    o_ref[...] = (out + aux_ref[1:2, :]).astype(o_ref.dtype)


def pack_params(conv_weights, conv_biases, fc_w, fc_b):
    """Pack conv/fc parameters into bf16 slabs + one small f32 bias slab."""
    # Per-tap conv weights stacked along the contraction (sublane) axis.
    w_taps = jnp.zeros((KMAX * H, F4PAD), jnp.float32)
    for i, k in enumerate(FILTER_SIZES):
        cols = slice(i * FILTERS, (i + 1) * FILTERS)
        for j in range(k):
            w_taps = w_taps.at[j * H:(j + 1) * H, cols].set(
                conv_weights[i][:, j * H:(j + 1) * H].T)         # (H, FILTERS)

    fc_pack = jnp.zeros((F4, OUT_PAD), jnp.float32)
    fc_pack = fc_pack.at[:, :NUM_CLASSES].set(fc_w)              # (F4, 2)

    aux = jnp.zeros((8, F4PAD), jnp.float32)
    aux = aux.at[0, :F4].set(jnp.concatenate(conv_biases))       # conv bias row
    aux = aux.at[1, :NUM_CLASSES].set(fc_b)                      # fc bias row
    return w_taps.astype(jnp.bfloat16), fc_pack.astype(jnp.bfloat16), aux


@jax.jit
def bert_cnn_forward(encoder_out, w_taps, fc_pack, aux):
    """encoder_out: (B, S, H) float32.  Returns logits (B, NUM_CLASSES)."""
    x = encoder_out.reshape(B * S, H).astype(jnp.float32)        # free reshape, no window build
    out = pl.pallas_call(
        _bert_cnn_head_kernel,
        out_shape=jax.ShapeDtypeStruct((B, OUT_PAD), jnp.float32),
        in_specs=[pl.BlockSpec(memory_space=pltpu.MemorySpace.VMEM)] * 4,
        out_specs=pl.BlockSpec(memory_space=pltpu.MemorySpace.VMEM),
        cost_estimate=pl.CostEstimate(flops=_FLOPS, transcendentals=0,
                                      bytes_accessed=_BYTES),
    )(x, w_taps, fc_pack, aux)
    return out[:, :NUM_CLASSES]


def reference_forward(encoder_out, conv_weights, conv_biases, fc_w, fc_b):
    """Plain-JAX reference of the TextCNN head (conv -> relu -> maxpool -> concat -> fc)."""
    feats = []
    for k, w, bv in zip(FILTER_SIZES, conv_weights, conv_biases):
        L = S - k + 1
        win = jnp.stack([encoder_out[:, j:j + L, :] for j in range(k)], axis=2)
        win = win.reshape(B, L, k * H)
        s = jnp.einsum('blc,fc->blf', win, w) + bv[None, None, :]
        s = jnp.maximum(s, 0.0)
        feats.append(jnp.max(s, axis=1))                         # (B, FILTERS)
    feat = jnp.concatenate(feats, axis=1)                        # (B, 4*FILTERS)
    return feat @ fc_w + fc_b[None, :]


def init_params(key):
    """Deterministic synthetic parameters (shapes follow the nn.Module __init__)."""
    keys = jax.random.split(key, 2 * len(FILTER_SIZES) + 3)
    conv_weights, conv_biases = [], []
    for i, k in enumerate(FILTER_SIZES):
        # nn.Conv1d(1, filters, (k, hidden)) weight (filters, 1, k, H) flattened to (filters, k*H).
        conv_weights.append(0.02 * jax.random.normal(keys[2 * i], (FILTERS, k * H), jnp.float32))
        conv_biases.append(0.02 * jax.random.normal(keys[2 * i + 1], (FILTERS,), jnp.float32))
    # nn.Linear(4*filters, 2): weight (2, 4*filters) -> pre-transposed (4*filters, 2).
    fc_w = 0.02 * jax.random.normal(keys[-3], (NUM_CLASSES, F4), jnp.float32).T
    fc_b = 0.02 * jax.random.normal(keys[-2], (NUM_CLASSES,), jnp.float32)
    # stand-in embedding table for the BERT encoder (see TODO above)
    emb = 0.02 * jax.random.normal(keys[-1], (VOCAB, H), jnp.float32)
    return conv_weights, conv_biases, fc_w, fc_b, emb


if __name__ == "__main__":
    key = jax.random.PRNGKey(0)
    k_param, k_ctx = jax.random.split(key)

    conv_weights, conv_biases, fc_w, fc_b, emb = init_params(k_param)

    # x = (context_token_ids, token_type_ids, attention_mask) as in the module
    context = jax.random.randint(k_ctx, (B, S), 0, VOCAB, dtype=jnp.int32)
    attn_mask = jnp.ones((B, S), dtype=jnp.int32)  # unused (BERT not re-implemented)

    # plain-JAX glue standing in for `encoder_out, pooled = self.bert(context, attention_mask=mask)`
    encoder_out = emb[context]                     # (B, S, H) float32

    w_taps, fc_pack, aux = pack_params(conv_weights, conv_biases, fc_w, fc_b)
    logits = bert_cnn_forward(encoder_out, w_taps, fc_pack, aux)
    jax.block_until_ready(logits)

    ref = reference_forward(encoder_out, conv_weights, conv_biases, fc_w, fc_b)
    assert logits.shape == (B, NUM_CLASSES)
    assert jnp.allclose(logits, ref, atol=1e-3, rtol=1e-2)
    print("KERNEL_OK")
</pallas_src>

<mosaic_0001>
module attributes {stable_mosaic.version = 11 : i64} {
  func.func @_bert_cnn_head_kernel(%arg0: memref<16x32xf32, #tpu.memory_space<vmem>>, %arg1: memref<160x128xbf16, #tpu.memory_space<vmem>>, %arg2: memref<32x128xbf16, #tpu.memory_space<vmem>>, %arg3: memref<8x128xf32, #tpu.memory_space<vmem>>, %arg4: memref<2x128xf32, #tpu.memory_space<vmem>>) attributes {dimension_semantics = [], scalar_prefetch = 0 : i64, scratch_operands = 0 : i64, tpu.core_type = #tpu.core_type<tc>} {
    %c0 = arith.constant 0 : index
    %c0_0 = arith.constant 0 : index
    %0 = vector.load %arg0[%c0, %c0_0] : memref<16x32xf32, #tpu.memory_space<vmem>>, vector<16x32xf32>
    %cst = arith.constant 0.000000e+00 : f32
    %1 = vector.broadcast %cst : f32 to vector<16x128xf32>
    %2 = arith.truncf %0 : vector<16x32xf32> to vector<16x32xbf16>
    %c0_1 = arith.constant 0 : index
    %c0_2 = arith.constant 0 : index
    %3 = vector.load %arg1[%c0_1, %c0_2] : memref<160x128xbf16, #tpu.memory_space<vmem>>, vector<32x128xbf16>
    %cst_3 = arith.constant dense<0.000000e+00> : vector<16x128xf32>
    %4 = tpu.matmul %2, %3, %cst_3 {dimension_numbers = #tpu.dot_dimension_numbers<[1], [0], [0], [1], [0, 0, 1, 1], [], []>} : vector<16x32xbf16>, vector<32x128xbf16>, vector<16x128xf32> -> vector<16x128xf32>
    %5 = arith.addf %1, %4 : vector<16x128xf32>
    %6 = vector.extract_strided_slice %0 {offsets = [1, 0], sizes = [15, 32], strides = [1, 1]} : vector<16x32xf32> to vector<15x32xf32>
    %cst_4 = arith.constant 0.000000e+00 : f32
    %7 = vector.broadcast %cst_4 : f32 to vector<1x32xf32>
    %8 = tpu.concatenate %6, %7 in 0 : vector<15x32xf32>, vector<1x32xf32> -> vector<16x32xf32>
    %9 = arith.truncf %8 : vector<16x32xf32> to vector<16x32xbf16>
    %c32 = arith.constant 32 : index
    %c0_5 = arith.constant 0 : index
    %10 = vector.load %arg1[%c32, %c0_5] : memref<160x128xbf16, #tpu.memory_space<vmem>>, vector<32x128xbf16>
    %cst_6 = arith.constant dense<0.000000e+00> : vector<16x128xf32>
    %11 = tpu.matmul %9, %10, %cst_6 {dimension_numbers = #tpu.dot_dimension_numbers<[1], [0], [0], [1], [0, 0, 1, 1], [], []>} : vector<16x32xbf16>, vector<32x128xbf16>, vector<16x128xf32> -> vector<16x128xf32>
    %12 = arith.addf %5, %11 : vector<16x128xf32>
    %13 = vector.extract_strided_slice %0 {offsets = [2, 0], sizes = [14, 32], strides = [1, 1]} : vector<16x32xf32> to vector<14x32xf32>
    %cst_7 = arith.constant 0.000000e+00 : f32
    %14 = vector.broadcast %cst_7 : f32 to vector<2x32xf32>
    %15 = tpu.concatenate %13, %14 in 0 : vector<14x32xf32>, vector<2x32xf32> -> vector<16x32xf32>
    %16 = arith.truncf %15 : vector<16x32xf32> to vector<16x32xbf16>
    %c64 = arith.constant 64 : index
    %c0_8 = arith.constant 0 : index
    %17 = vector.load %arg1[%c64, %c0_8] : memref<160x128xbf16, #tpu.memory_space<vmem>>, vector<32x128xbf16>
    %cst_9 = arith.constant dense<0.000000e+00> : vector<16x128xf32>
    %18 = tpu.matmul %16, %17, %cst_9 {dimension_numbers = #tpu.dot_dimension_numbers<[1], [0], [0], [1], [0, 0, 1, 1], [], []>} : vector<16x32xbf16>, vector<32x128xbf16>, vector<16x128xf32> -> vector<16x128xf32>
    %19 = arith.addf %12, %18 : vector<16x128xf32>
    %20 = vector.extract_strided_slice %0 {offsets = [3, 0], sizes = [13, 32], strides = [1, 1]} : vector<16x32xf32> to vector<13x32xf32>
    %cst_10 = arith.constant 0.000000e+00 : f32
    %21 = vector.broadcast %cst_10 : f32 to vector<3x32xf32>
    %22 = tpu.concatenate %20, %21 in 0 : vector<13x32xf32>, vector<3x32xf32> -> vector<16x32xf32>
    %23 = arith.truncf %22 : vector<16x32xf32> to vector<16x32xbf16>
    %c96 = arith.constant 96 : index
    %c0_11 = arith.constant 0 : index
    %24 = vector.load %arg1[%c96, %c0_11] : memref<160x128xbf16, #tpu.memory_space<vmem>>, vector<32x128xbf16>
    %cst_12 = arith.constant dense<0.000000e+00> : vector<16x128xf32>
    %25 = tpu.matmul %23, %24, %cst_12 {dimension_numbers = #tpu.dot_dimension_numbers<[1], [0], [0], [1], [0, 0, 1, 1], [], []>} : vector<16x32xbf16>, vector<32x128xbf16>, vector<16x128xf32> -> vector<16x128xf32>
    %26 = arith.addf %19, %25 : vector<16x128xf32>
    %27 = vector.extract_strided_slice %0 {offsets = [4, 0], sizes = [12, 32], strides = [1, 1]} : vector<16x32xf32> to vector<12x32xf32>
    %cst_13 = arith.constant 0.000000e+00 : f32
    %28 = vector.broadcast %cst_13 : f32 to vector<4x32xf32>
    %29 = tpu.concatenate %27, %28 in 0 : vector<12x32xf32>, vector<4x32xf32> -> vector<16x32xf32>
    %30 = arith.truncf %29 : vector<16x32xf32> to vector<16x32xbf16>
    %c128 = arith.constant 128 : index
    %c0_14 = arith.constant 0 : index
    %31 = vector.load %arg1[%c128, %c0_14] : memref<160x128xbf16, #tpu.memory_space<vmem>>, vector<32x128xbf16>
    %cst_15 = arith.constant dense<0.000000e+00> : vector<16x128xf32>
    %32 = tpu.matmul %30, %31, %cst_15 {dimension_numbers = #tpu.dot_dimension_numbers<[1], [0], [0], [1], [0, 0, 1, 1], [], []>} : vector<16x32xbf16>, vector<32x128xbf16>, vector<16x128xf32> -> vector<16x128xf32>
    %33 = arith.addf %26, %32 : vector<16x128xf32>
    %c0_16 = arith.constant 0 : index
    %c0_17 = arith.constant 0 : index
    %34 = vector.load %arg3[%c0_16, %c0_17] : memref<8x128xf32, #tpu.memory_space<vmem>>, vector<1x128xf32>
    %35 = vector.broadcast %34 : vector<1x128xf32> to vector<16x128xf32>
    %36 = arith.addf %33, %35 : vector<16x128xf32>
    %cst_18 = arith.constant 0.000000e+00 : f32
    %37 = vector.broadcast %cst_18 : f32 to vector<16x128xf32>
    %38 = arith.maximumf %36, %37 : vector<16x128xf32>
    %39 = vector.shape_cast %38 : vector<16x128xf32> to vector<2x8x128xf32>
    %40 = tpu.iota {dimensions = array<i32: 1>} : vector<2x8x128xi32>
    %41 = tpu.iota {dimensions = array<i32: 2>} : vector<2x8x128xi32>
    %c8_i32 = arith.constant 8 : i32
    %42 = vector.broadcast %c8_i32 : i32 to vector<2x8x128xi32>
    %c0_i32 = arith.constant 0 : i32
    %43 = vector.broadcast %c0_i32 : i32 to vector<2x8x128xi32>
    %44 = arith.cmpi sge, %41, %43 : vector<2x8x128xi32>
    %c8_i32_19 = arith.constant 8 : i32
    %45 = vector.broadcast %c8_i32_19 : i32 to vector<2x8x128xi32>
    %46 = arith.cmpi slt, %41, %45 : vector<2x8x128xi32>
    %47 = arith.andi %44, %46 : vector<2x8x128xi1>
    %c6_i32 = arith.constant 6 : i32
    %48 = vector.broadcast %c6_i32 : i32 to vector<2x8x128xi32>
    %49 = arith.select %47, %48, %42 : vector<2x8x128xi1>, vector<2x8x128xi32>
    %c8_i32_20 = arith.constant 8 : i32
    %50 = vector.broadcast %c8_i32_20 : i32 to vector<2x8x128xi32>
    %51 = arith.cmpi sge, %41, %50 : vector<2x8x128xi32>
    %c16_i32 = arith.constant 16 : i32
    %52 = vector.broadcast %c16_i32 : i32 to vector<2x8x128xi32>
    %53 = arith.cmpi slt, %41, %52 : vector<2x8x128xi32>
    %54 = arith.andi %51, %53 : vector<2x8x128xi1>
    %c5_i32 = arith.constant 5 : i32
    %55 = vector.broadcast %c5_i32 : i32 to vector<2x8x128xi32>
    %56 = arith.select %54, %55, %49 : vector<2x8x128xi1>, vector<2x8x128xi32>
    %c16_i32_21 = arith.constant 16 : i32
    %57 = vector.broadcast %c16_i32_21 : i32 to vector<2x8x128xi32>
    %58 = arith.cmpi sge, %41, %57 : vector<2x8x128xi32>
    %c24_i32 = arith.constant 24 : i32
    %59 = vector.broadcast %c24_i32 : i32 to vector<2x8x128xi32>
    %60 = arith.cmpi slt, %41, %59 : vector<2x8x128xi32>
    %61 = arith.andi %58, %60 : vector<2x8x128xi1>
    %c4_i32 = arith.constant 4 : i32
    %62 = vector.broadcast %c4_i32 : i32 to vector<2x8x128xi32>
    %63 = arith.select %61, %62, %56 : vector<2x8x128xi1>, vector<2x8x128xi32>
    %c24_i32_22 = arith.constant 24 : i32
    %64 = vector.broadcast %c24_i32_22 : i32 to vector<2x8x128xi32>
    %65 = arith.cmpi sge, %41, %64 : vector<2x8x128xi32>
    %c32_i32 = arith.constant 32 : i32
    %66 = vector.broadcast %c32_i32 : i32 to vector<2x8x128xi32>
    %67 = arith.cmpi slt, %41, %66 : vector<2x8x128xi32>
    %68 = arith.andi %65, %67 : vector<2x8x128xi1>
    %c3_i32 = arith.constant 3 : i32
    %69 = vector.broadcast %c3_i32 : i32 to vector<2x8x128xi32>
    %70 = arith.select %68, %69, %63 : vector<2x8x128xi1>, vector<2x8x128xi32>
    %71 = arith.cmpi sle, %40, %70 : vector<2x8x128xi32>
    %cst_23 = arith.constant -1.000000e+30 : f32
    %72 = vector.broadcast %cst_23 : f32 to vector<2x8x128xf32>
    %73 = arith.select %71, %39, %72 : vector<2x8x128xi1>, vector<2x8x128xf32>
    %cst_24 = arith.constant dense<0xFF800000> : vector<2x128xf32>
    %74 = vector.multi_reduction <maximumf>, %73, %cst_24 [1] : vector<2x8x128xf32> to vector<2x128xf32>
    %75 = vector.extract_strided_slice %74 {offsets = [0, 0], sizes = [2, 32], strides = [1, 1]} : vector<2x128xf32> to vector<2x32xf32>
    %76 = arith.truncf %75 : vector<2x32xf32> to vector<2x32xbf16>
    %c0_25 = arith.constant 0 : index
    %c0_26 = arith.constant 0 : index
    %77 = vector.load %arg2[%c0_25, %c0_26] : memref<32x128xbf16, #tpu.memory_space<vmem>>, vector<32x128xbf16>
    %cst_27 = arith.constant dense<0.000000e+00> : vector<2x128xf32>
    %78 = tpu.matmul %76, %77, %cst_27 {dimension_numbers = #tpu.dot_dimension_numbers<[1], [0], [0], [1], [0, 0, 1, 1], [], []>} : vector<2x32xbf16>, vector<32x128xbf16>, vector<2x128xf32> -> vector<2x128xf32>
    %c1 = arith.constant 1 : index
    %c0_28 = arith.constant 0 : index
    %79 = vector.load %arg3[%c1, %c0_28] : memref<8x128xf32, #tpu.memory_space<vmem>>, vector<1x128xf32>
    %80 = vector.broadcast %79 : vector<1x128xf32> to vector<2x128xf32>
    %81 = arith.addf %78, %80 : vector<2x128xf32>
    %c0_29 = arith.constant 0 : index
    %c0_30 = arith.constant 0 : index
    %82 = vector.load %arg4[%c0_29, %c0_30] : memref<2x128xf32, #tpu.memory_space<vmem>>, vector<2x128xf32>
    tpu.vector_store %arg4[%c0_29, %c0_30], %81 {strides = array<i32>} : memref<2x128xf32, #tpu.memory_space<vmem>>, vector<2x128xf32>,
    return
  }
}

</mosaic_0001>

<llo_original>
// kernel: bert_cnn_forward.1
$region0: #{bert_cnn_forward.1}
  #allocation0 [shape = 'u32[]', space=smem, size = 0x4, offset = 0x4, fixed_abs, tag = 'smem constant byte address 0x4 - core index']
  #allocation1 [shape = 'u32[144,128]{1,0:T(1,128)}', space=vmem, size = 0x12000, scoped, tag = 'internal scratch']
  %s0 = inlined_call_operand.hbm [shape: f32[16,32], index: 0, kind: input, shape index: {}]
  %s1 = inlined_call_operand.hbm [shape: bf16[160,128], index: 1, kind: input, shape index: {}]
  %s2 = inlined_call_operand.hbm [shape: bf16[32,128], index: 2, kind: input, shape index: {}]
  %s3 = inlined_call_operand.vmem [shape: f32[8,128], index: 3, kind: input, shape index: {}]
  %s4 = inlined_call_operand.hbm [shape: f32[2,128], index: 4, kind: output, shape index: {}]
  %s5 = sld [smem:[#allocation0]]
  $region38: #{bert_cnn_forward.1} parent=0
    _
  %s7 = ssub.s32 1, %s5
  %s8 = scalar_select 0, %s7, %s5
  $region1: #{bert_cnn_forward.1} parent=0
    #allocation2 [shape = 'u8[8192]{0}', space=vmem, size = 0x2000, scoped, tag = 'input window, operand 0, single buffered']
    #allocation3 [shape = 's32[1]{0}', space=sflag, size = 0x4, scoped, tag = 'scoped memory for bert_cnn_forward.1']
    #allocation4 [shape = 's32[1]{0}', space=sflag, size = 0x4, scoped, tag = 'scoped memory for bert_cnn_forward.1']
    #allocation5 [shape = 'u8[40960]{0}', space=vmem, size = 0xa000, scoped, tag = 'input window, operand 1, single buffered']
    #allocation6 [shape = 's32[1]{0}', space=sflag, size = 0x4, scoped, tag = 'scoped memory for bert_cnn_forward.1']
    #allocation7 [shape = 'u8[8192]{0}', space=vmem, size = 0x2000, scoped, tag = 'input window, operand 2, single buffered']
    #allocation8 [shape = 'u8[1024]{0}', space=vmem, size = 0x400, scoped, tag = 'output window, operand 0, single buffered']
    %9 = vsyncpa [#allocation3], 0
    %10 = vsyncpa [#allocation6], 0
    %11 = vsyncpa [#allocation4], 0
    // Predicated region
    $region2: #{bert_cnn_forward.1} parent=1 // pred_check
      _
    $region3: #{bert_cnn_forward.1} parent=1 // pred_check_branch
      %13 = sbr.rel (0) target = $region5
    $region4: #{bert_cnn_forward.1} parent=1 // pred_region
      %s15 = ssub.s32 256, 256
      %16 = vsyncadd [#allocation3], %s15
      %s17 = sshll.u32 [#allocation2], 4
      %s18 = int_to_ptr.vmem [resolvable:$true] %s17
      %23 = dma.hbm_to_vmem [thread:$0]  %s0, 256, %s18, [#allocation3], 128, 128, 8
    $region5: #{bert_cnn_forward.1} parent=1 // pred_fallthru
      _
    // Predicated region
    $region6: #{bert_cnn_forward.1} parent=1 // pred_check
      _
    $region7: #{bert_cnn_forward.1} parent=1 // pred_check_branch
      %25 = sbr.rel (0) target = $region9
    $region8: #{bert_cnn_forward.1} parent=1 // pred_region
      %s27 = ssub.s32 1280, 1280
      %28 = vsyncadd [#allocation6], %s27
      %s29 = sshll.u32 [#allocation5], 4
      %s30 = int_to_ptr.vmem [resolvable:$true] %s29
      %35 = dma.hbm_to_vmem [thread:$0]  %s1, 1280, %s30, [#allocation6], 64, 64, 4
    $region9: #{bert_cnn_forward.1} parent=1 // pred_fallthru
      _
    // Predicated region
    $region10: #{bert_cnn_forward.1} parent=1 // pred_check
      _
    $region11: #{bert_cnn_forward.1} parent=1 // pred_check_branch
      %37 = sbr.rel (0) target = $region13
    $region12: #{bert_cnn_forward.1} parent=1 // pred_region
      %s39 = ssub.s32 256, 256
      %40 = vsyncadd [#allocation6], %s39
      %s41 = sshll.u32 [#allocation7], 4
      %s42 = int_to_ptr.vmem [resolvable:$true] %s41
      %47 = dma.hbm_to_vmem [thread:$0]  %s2, 256, %s42, [#allocation6], 64, 64, 4
    $region13: #{bert_cnn_forward.1} parent=1 // pred_fallthru
      _
    // Predicated region
    $region14: #{bert_cnn_forward.1} parent=1 // pred_check
      _
    $region15: #{bert_cnn_forward.1} parent=1 // pred_check_branch
      %49 = sbr.rel (0) target = $region17
    $region16: #{bert_cnn_forward.1} parent=1 // pred_region
      _
    $region17: #{bert_cnn_forward.1} parent=1 // pred_fallthru
      _
    // Predicated region
    $region18: #{bert_cnn_forward.1} parent=1 // pred_check
      _
    $region19: #{bert_cnn_forward.1} parent=1 // pred_check_branch
      %51 = sbr.rel (0) target = $region21
    $region20: #{bert_cnn_forward.1} parent=1 // pred_region
      %52 = dma.done [#allocation3], 256
    $region21: #{bert_cnn_forward.1} parent=1 // pred_fallthru
      _
    // Predicated region
    $region22: #{bert_cnn_forward.1} parent=1 // pred_check
      _
    $region23: #{bert_cnn_forward.1} parent=1 // pred_check_branch
      %54 = sbr.rel (0) target = $region25
    $region24: #{bert_cnn_forward.1} parent=1 // pred_region
      %55 = dma.done [#allocation6], 1280
    $region25: #{bert_cnn_forward.1} parent=1 // pred_fallthru
      _
    // Predicated region
    $region26: #{bert_cnn_forward.1} parent=1 // pred_check
      _
    $region27: #{bert_cnn_forward.1} parent=1 // pred_check_branch
      %57 = sbr.rel (0) target = $region29
    $region28: #{bert_cnn_forward.1} parent=1 // pred_region
      %58 = dma.done [#allocation6], 256
    $region29: #{bert_cnn_forward.1} parent=1 // pred_fallthru
      _
    %v60 = vld [vmem:[#allocation2] sm:$0xff]
    %v61 = vld [vmem:[#allocation2 + $0x8] sm:$0xff]
    %v62 = vpack.c.bf16 %v61, %v60
    %v63 = vld [vmem:[#allocation5] sm:$0xf]
    %v64 = vld [vmem:[#allocation5 + $0x4] sm:$0xf]
    %v65 = vld [vmem:[#allocation5 + $0x8] sm:$0xf]
    %v66 = vld [vmem:[#allocation5 + $0xc] sm:$0xf]
    %vm69 = vcmask 1046528
    %v70 = vrot.slane %v60, 1
    %v71 = vrot.slane %v61, 1
    %v72 = vsel %vm69, %v70, %v71
    %v75 = vsel %vm69, %v71, 0.0
    %v76 = vpack.c.bf16 %v75, %v72
    %v77 = vld [vmem:[#allocation5 + $0x10] sm:$0xf]
    %v78 = vld [vmem:[#allocation5 + $0x14] sm:$0xf]
    %v79 = vld [vmem:[#allocation5 + $0x18] sm:$0xf]
    %v80 = vld [vmem:[#allocation5 + $0x1c] sm:$0xf]
    %v85 = vunpack.c.l.b16 %v77
    %v86 = vunpack.c.l.b16 %v78
    %v87 = vunpack.c.l.b16 %v79
    %v88 = vunpack.c.l.b16 %v80
    %v89 = vpack.c.b16 %v86, %v85
    %v90 = vpack.c.b16 %v88, %v87
    %vm93 = vcmask 261120
    %v95 = vsel %vm93, %v76, 0
    %97 = vmatprep.subr.bf16.mxu0 0
    %98 = vmatpush1.bf16.msra.mxu0 %v89
    %99 = vmatprep.subr.bf16.mxu0 0
    %100 = vmatpush1.bf16.msra.mxu0 %v90
    %101 = vmatprep.subr.bf16.mxu0 0
    %102 = vmatpush1.bf16.msra.mxu0 0
    %103 = vmatprep.subr.bf16.mxu0 0
    %104 = vmatpush1.bf16.msra.mxu0 0
    %105 = vmatprep.subr.bf16.mxu0 0
    %106 = vmatpush1.bf16.msra.mxu0 0
    %107 = vmatprep.subr.bf16.mxu0 0
    %108 = vmatpush1.bf16.msra.mxu0 0
    %109 = vmatprep.subr.bf16.mxu0 0
    %110 = vmatpush1.bf16.msra.mxu0 0
    %111 = vmatprep.subr.bf16.mxu0 0
    %112 = vmatpush1.bf16.msra.mxu0 0
    %113 = vmatprep.subr.bf16.mxu0 0
    %114 = vmatpush1.bf16.msra.mxu0 0
    %115 = vmatprep.subr.bf16.mxu0 0
    %116 = vmatpush1.bf16.msra.mxu0 0
    %117 = vmatprep.subr.bf16.mxu0 0
    %118 = vmatpush1.bf16.msra.mxu0 0
    %119 = vmatprep.subr.bf16.mxu0 0
    %120 = vmatpush1.bf16.msra.mxu0 0
    %121 = vmatprep.subr.bf16.mxu0 0
    %122 = vmatpush1.bf16.msra.mxu0 0
    %123 = vmatprep.subr.bf16.mxu0 0
    %124 = vmatpush1.bf16.msra.mxu0 0
    %125 = vmatprep.subr.bf16.mxu0 0
    %126 = vmatpush1.bf16.msra.mxu0 0
    %127 = vmatprep.subr.bf16.mxu0 0
    %128 = vmatpush1.bf16.msra.mxu0 0
    %129 = vmatprep.mubr.bf16.mxu0 0
    %130 = vmatmul.mubr.bf16.gmra.mrb[0].mxu0 %v95
    %v131 = vpop.f32.mrb[0].mxu0
    %v132 = vadd.f32 0.0, %v131
    %v133 = vpop.f32.mrb[0].mxu0
    %v134 = vpop.f32.mrb[0].mxu0
    %v135 = vadd.f32 0.0, %v134
    %v136 = vpop.f32.mrb[0].mxu0
    %137 = vdwg.mxu0
    %v142 = vunpack.c.l.b16 %v63
    %v143 = vunpack.c.l.b16 %v64
    %v144 = vunpack.c.l.b16 %v65
    %v145 = vunpack.c.l.b16 %v66
    %v146 = vpack.c.b16 %v143, %v142
    %v147 = vpack.c.b16 %v145, %v144
    %v151 = vsel %vm93, %v62, 0
    %153 = vmatprep.subr.bf16.mxu0 0
    %154 = vmatpush1.bf16.msra.mxu0 %v146
    %155 = vmatprep.subr.bf16.mxu0 0
    %156 = vmatpush1.bf16.msra.mxu0 %v147
    %157 = vmatprep.subr.bf16.mxu0 0
    %158 = vmatpush1.bf16.msra.mxu0 0
    %159 = vmatprep.subr.bf16.mxu0 0
    %160 = vmatpush1.bf16.msra.mxu0 0
    %161 = vmatprep.subr.bf16.mxu0 0
    %162 = vmatpush1.bf16.msra.mxu0 0
    %163 = vmatprep.subr.bf16.mxu0 0
    %164 = vmatpush1.bf16.msra.mxu0 0
    %165 = vmatprep.subr.bf16.mxu0 0
    %166 = vmatpush1.bf16.msra.mxu0 0
    %167 = vmatprep.subr.bf16.mxu0 0
    %168 = vmatpush1.bf16.msra.mxu0 0
    %169 = vmatprep.subr.bf16.mxu0 0
    %170 = vmatpush1.bf16.msra.mxu0 0
    %171 = vmatprep.subr.bf16.mxu0 0
    %172 = vmatpush1.bf16.msra.mxu0 0
    %173 = vmatprep.subr.bf16.mxu0 0
    %174 = vmatpush1.bf16.msra.mxu0 0
    %175 = vmatprep.subr.bf16.mxu0 0
    %176 = vmatpush1.bf16.msra.mxu0 0
    %177 = vmatprep.subr.bf16.mxu0 0
    %178 = vmatpush1.bf16.msra.mxu0 0
    %179 = vmatprep.subr.bf16.mxu0 0
    %180 = vmatpush1.bf16.msra.mxu0 0
    %181 = vmatprep.subr.bf16.mxu0 0
    %182 = vmatpush1.bf16.msra.mxu0 0
    %183 = vmatprep.subr.bf16.mxu0 0
    %184 = vmatpush1.bf16.msra.mxu0 0
    %185 = vmatprep.mubr.bf16.mxu0 0
    %186 = vmatmul.mubr.bf16.gmra.mrb[0].mxu0 %v151
    %v187 = vpop.f32.mrb[0].mxu0
    %v188 = vadd.f32 %v132, %v187
    %v189 = vpop.f32.mrb[0].mxu0
    %v190 = vpop.f32.mrb[0].mxu0
    %v191 = vadd.f32 %v135, %v190
    %v192 = vpop.f32.mrb[0].mxu0
    %193 = vdwg.mxu0
    %vm194 = vcmask 1045504
    %v195 = vrot.slane %v60, 2
    %v196 = vrot.slane %v61, 2
    %v197 = vsel %vm194, %v195, %v196
    %v200 = vsel %vm194, %v196, 0.0
    %v201 = vpack.c.bf16 %v200, %v197
    %v202 = vld [vmem:[#allocation5 + $0x20] sm:$0xf]
    %v203 = vld [vmem:[#allocation5 + $0x24] sm:$0xf]
    %v204 = vld [vmem:[#allocation5 + $0x28] sm:$0xf]
    %v205 = vld [vmem:[#allocation5 + $0x2c] sm:$0xf]
    %v210 = vunpack.c.l.b16 %v202
    %v211 = vunpack.c.l.b16 %v203
    %v212 = vunpack.c.l.b16 %v204
    %v213 = vunpack.c.l.b16 %v205
    %v214 = vpack.c.b16 %v211, %v210
    %v215 = vpack.c.b16 %v213, %v212
    %v219 = vsel %vm93, %v201, 0
    %221 = vmatprep.subr.bf16.mxu0 0
    %222 = vmatpush1.bf16.msra.mxu0 %v214
    %223 = vmatprep.subr.bf16.mxu0 0
    %224 = vmatpush1.bf16.msra.mxu0 %v215
    %225 = vmatprep.subr.bf16.mxu0 0
    %226 = vmatpush1.bf16.msra.mxu0 0
    %227 = vmatprep.subr.bf16.mxu0 0
    %228 = vmatpush1.bf16.msra.mxu0 0
    %229 = vmatprep.subr.bf16.mxu0 0
    %230 = vmatpush1.bf16.msra.mxu0 0
    %231 = vmatprep.subr.bf16.mxu0 0
    %232 = vmatpush1.bf16.msra.mxu0 0
    %233 = vmatprep.subr.bf16.mxu0 0
    %234 = vmatpush1.bf16.msra.mxu0 0
    %235 = vmatprep.subr.bf16.mxu0 0
    %236 = vmatpush1.bf16.msra.mxu0 0
    %237 = vmatprep.subr.bf16.mxu0 0
    %238 = vmatpush1.bf16.msra.mxu0 0
    %239 = vmatprep.subr.bf16.mxu0 0
    %240 = vmatpush1.bf16.msra.mxu0 0
    %241 = vmatprep.subr.bf16.mxu0 0
    %242 = vmatpush1.bf16.msra.mxu0 0
    %243 = vmatprep.subr.bf16.mxu0 0
    %244 = vmatpush1.bf16.msra.mxu0 0
    %245 = vmatprep.subr.bf16.mxu0 0
    %246 = vmatpush1.bf16.msra.mxu0 0
    %247 = vmatprep.subr.bf16.mxu0 0
    %248 = vmatpush1.bf16.msra.mxu0 0
    %249 = vmatprep.subr.bf16.mxu0 0
    %250 = vmatpush1.bf16.msra.mxu0 0
    %251 = vmatprep.subr.bf16.mxu0 0
    %252 = vmatpush1.bf16.msra.mxu0 0
    %253 = vmatprep.mubr.bf16.mxu0 0
    %254 = vmatmul.mubr.bf16.gmra.mrb[0].mxu0 %v219
    %v255 = vpop.f32.mrb[0].mxu0
    %v256 = vadd.f32 0.0, %v255
    %v257 = vpop.f32.mrb[0].mxu0
    %v258 = vpop.f32.mrb[0].mxu0
    %v259 = vadd.f32 0.0, %v258
    %v260 = vpop.f32.mrb[0].mxu0
    %261 = vdwg.mxu0
    %v262 = vadd.f32 %v188, %v256
    %v263 = vadd.f32 %v191, %v259
    %vm264 = vcmask 1044480
    %v265 = vrot.slane %v60, 3
    %v266 = vrot.slane %v61, 3
    %v267 = vsel %vm264, %v265, %v266
    %v270 = vsel %vm264, %v266, 0.0
    %v271 = vpack.c.bf16 %v270, %v267
    %v272 = vld [vmem:[#allocation5 + $0x30] sm:$0xf]
    %v273 = vld [vmem:[#allocation5 + $0x34] sm:$0xf]
    %v274 = vld [vmem:[#allocation5 + $0x38] sm:$0xf]
    %v275 = vld [vmem:[#allocation5 + $0x3c] sm:$0xf]
    %v280 = vunpack.c.l.b16 %v272
    %v281 = vunpack.c.l.b16 %v273
    %v282 = vunpack.c.l.b16 %v274
    %v283 = vunpack.c.l.b16 %v275
    %v284 = vpack.c.b16 %v281, %v280
    %v285 = vpack.c.b16 %v283, %v282
    %v289 = vsel %vm93, %v271, 0
    %291 = vmatprep.subr.bf16.mxu0 0
    %292 = vmatpush1.bf16.msra.mxu0 %v284
    %293 = vmatprep.subr.bf16.mxu0 0
    %294 = vmatpush1.bf16.msra.mxu0 %v285
    %295 = vmatprep.subr.bf16.mxu0 0
    %296 = vmatpush1.bf16.msra.mxu0 0
    %297 = vmatprep.subr.bf16.mxu0 0
    %298 = vmatpush1.bf16.msra.mxu0 0
    %299 = vmatprep.subr.bf16.mxu0 0
    %300 = vmatpush1.bf16.msra.mxu0 0
    %301 = vmatprep.subr.bf16.mxu0 0
    %302 = vmatpush1.bf16.msra.mxu0 0
    %303 = vmatprep.subr.bf16.mxu0 0
    %304 = vmatpush1.bf16.msra.mxu0 0
    %305 = vmatprep.subr.bf16.mxu0 0
    %306 = vmatpush1.bf16.msra.mxu0 0
    %307 = vmatprep.subr.bf16.mxu0 0
    %308 = vmatpush1.bf16.msra.mxu0 0
    %309 = vmatprep.subr.bf16.mxu0 0
    %310 = vmatpush1.bf16.msra.mxu0 0
    %311 = vmatprep.subr.bf16.mxu0 0
    %312 = vmatpush1.bf16.msra.mxu0 0
    %313 = vmatprep.subr.bf16.mxu0 0
    %314 = vmatpush1.bf16.msra.mxu0 0
    %315 = vmatprep.subr.bf16.mxu0 0
    %316 = vmatpush1.bf16.msra.mxu0 0
    %317 = vmatprep.subr.bf16.mxu0 0
    %318 = vmatpush1.bf16.msra.mxu0 0
    %319 = vmatprep.subr.bf16.mxu0 0
    %320 = vmatpush1.bf16.msra.mxu0 0
    %321 = vmatprep.subr.bf16.mxu0 0
    %322 = vmatpush1.bf16.msra.mxu0 0
    %323 = vmatprep.mubr.bf16.mxu0 0
    %324 = vmatmul.mubr.bf16.gmra.mrb[0].mxu0 %v289
    %v325 = vpop.f32.mrb[0].mxu0
    %v326 = vadd.f32 0.0, %v325
    %v327 = vpop.f32.mrb[0].mxu0
    %v328 = vpop.f32.mrb[0].mxu0
    %v329 = vadd.f32 0.0, %v328
    %v330 = vpop.f32.mrb[0].mxu0
    %331 = vdwg.mxu0
    %v332 = vadd.f32 %v262, %v326
    %v333 = vadd.f32 %v263, %v329
    %vm334 = vcmask 1043456
    %v335 = vrot.slane %v60, 4
    %v336 = vrot.slane %v61, 4
    %v337 = vsel %vm334, %v335, %v336
    %v340 = vsel %vm334, %v336, 0.0
    %v341 = vpack.c.bf16 %v340, %v337
    %v342 = vld [vmem:[#allocation5 + $0x40] sm:$0xf]
    %v343 = vld [vmem:[#allocation5 + $0x44] sm:$0xf]
    %v344 = vld [vmem:[#allocation5 + $0x48] sm:$0xf]
    %v345 = vld [vmem:[#allocation5 + $0x4c] sm:$0xf]
    %v350 = vunpack.c.l.b16 %v342
    %v351 = vunpack.c.l.b16 %v343
    %v352 = vunpack.c.l.b16 %v344
    %v353 = vunpack.c.l.b16 %v345
    %v354 = vpack.c.b16 %v351, %v350
    %v355 = vpack.c.b16 %v353, %v352
    %v359 = vsel %vm93, %v341, 0
    %361 = vmatprep.subr.bf16.mxu0 0
    %362 = vmatpush1.bf16.msra.mxu0 %v354
    %363 = vmatprep.subr.bf16.mxu0 0
    %364 = vmatpush1.bf16.msra.mxu0 %v355
    %365 = vmatprep.subr.bf16.mxu0 0
    %366 = vmatpush1.bf16.msra.mxu0 0
    %367 = vmatprep.subr.bf16.mxu0 0
    %368 = vmatpush1.bf16.msra.mxu0 0
    %369 = vmatprep.subr.bf16.mxu0 0
    %370 = vmatpush1.bf16.msra.mxu0 0
    %371 = vmatprep.subr.bf16.mxu0 0
    %372 = vmatpush1.bf16.msra.mxu0 0
    %373 = vmatprep.subr.bf16.mxu0 0
    %374 = vmatpush1.bf16.msra.mxu0 0
    %375 = vmatprep.subr.bf16.mxu0 0
    %376 = vmatpush1.bf16.msra.mxu0 0
    %377 = vmatprep.subr.bf16.mxu0 0
    %378 = vmatpush1.bf16.msra.mxu0 0
    %379 = vmatprep.subr.bf16.mxu0 0
    %380 = vmatpush1.bf16.msra.mxu0 0
    %381 = vmatprep.subr.bf16.mxu0 0
    %382 = vmatpush1.bf16.msra.mxu0 0
    %383 = vmatprep.subr.bf16.mxu0 0
    %384 = vmatpush1.bf16.msra.mxu0 0
    %385 = vmatprep.subr.bf16.mxu0 0
    %386 = vmatpush1.bf16.msra.mxu0 0
    %387 = vmatprep.subr.bf16.mxu0 0
    %388 = vmatpush1.bf16.msra.mxu0 0
    %389 = vmatprep.subr.bf16.mxu0 0
    %390 = vmatpush1.bf16.msra.mxu0 0
    %391 = vmatprep.subr.bf16.mxu0 0
    %392 = vmatpush1.bf16.msra.mxu0 0
    %393 = vmatprep.mubr.bf16.mxu0 0
    %394 = vmatmul.mubr.bf16.gmra.mrb[0].mxu0 %v359
    %v395 = vpop.f32.mrb[0].mxu0
    %v396 = vadd.f32 0.0, %v395
    %v397 = vpop.f32.mrb[0].mxu0
    %v398 = vpop.f32.mrb[0].mxu0
    %v399 = vadd.f32 0.0, %v398
    %v400 = vpop.f32.mrb[0].mxu0
    %401 = vdwg.mxu0
    %v402 = vadd.f32 %v332, %v396
    %v403 = vadd.f32 %v333, %v399
    %v404 = vld [vmem:[%s3] sm:$0x1]
    %v405 = vlaneseq
    %v406 = vshrl.u32 %v405, 7
    %v407 = vsub.s32 0, %v406
    %v408 = vrot.slane %v404, %v407
    %v409 = vadd.f32 %v402, %v408
    %v410 = vadd.f32 %v403, %v408
    %v411 = vmax.f32 %v409, 0.0
    %v412 = vmax.f32 %v410, 0.0
    %v413 = vlaneseq
    %v414 = vshrl.u32 %v413, 7
    %v415 = vlaneseq
    %v416 = vand.u32 %v415, 127
    %vm417 = vcmp.ge.s32.totalorder %v416, 0
    %vm418 = vcmp.lt.s32.totalorder %v416, 8
    %vm419 = vmand %vm417, %vm418
    %v420 = vsel %vm419, 6, 8
    %vm421 = vcmp.ge.s32.totalorder %v416, 8
    %vm422 = vcmp.lt.s32.totalorder %v416, 16
    %vm423 = vmand %vm421, %vm422
    %v424 = vsel %vm423, 5, %v420
    %vm425 = vcmp.ge.s32.totalorder %v416, 16
    %vm426 = vcmp.lt.s32.totalorder %v416, 24
    %vm427 = vmand %vm425, %vm426
    %v428 = vsel %vm427, 4, %v424
    %vm429 = vcmp.ge.s32.totalorder %v416, 24
    %vm430 = vcmp.lt.s32.totalorder %v416, 32
    %vm431 = vmand %vm429, %vm430
    %v432 = vsel %vm431, 3, %v428
    %vm433 = vcmp.le.s32.totalorder %v414, %v432
    %v434 = vsel %vm433, %v411, -1e+30
    %v435 = vsel %vm433, %v412, -1e+30
    %v436 = vrot.slane %v434, 4
    %v437 = vmax.f32 %v434, %v436
    %v438 = vrot.slane %v437, 2
    %v439 = vmax.f32 %v437, %v438
    %v440 = vrot.slane %v439, 1
    %v441 = vmax.f32 %v439, %v440
    %v442 = vrot.slane %v435, 4
    %v443 = vmax.f32 %v435, %v442
    %v444 = vrot.slane %v443, 2
    %v445 = vmax.f32 %v443, %v444
    %v446 = vrot.slane %v445, 1
    %v447 = vmax.f32 %v445, %v446
    %v448 = vpack.c.bf16 %v441, %v441
    %v449 = vpack.c.bf16 %v447, %v447
    %v450 = vld [vmem:[#allocation7] sm:$0xf]
    %v451 = vld [vmem:[#allocation7 + $0x4] sm:$0xf]
    %v452 = vld [vmem:[#allocation7 + $0x8] sm:$0xf]
    %v453 = vld [vmem:[#allocation7 + $0xc] sm:$0xf]
    %v454 = vld [vmem:[%s3 + $0x1] sm:$0x1]
    %v455 = vlaneseq
    %v456 = vshrl.u32 %v455, 7
    %v457 = vsub.s32 0, %v456
    %v458 = vrot.slane %v454, %v457
    %v461 = vunpack.c.l.b16 %v448
    %v462 = vunpack.c.l.b16 %v449
    %vm463 = vcmask 1041409
    %v464 = vsel %vm463, %v462, %v461
    %v465 = vpack.c.b16 %v464, %v464
    %v470 = vunpack.c.l.b16 %v450
    %v471 = vunpack.c.l.b16 %v451
    %v472 = vunpack.c.l.b16 %v452
    %v473 = vunpack.c.l.b16 %v453
    %v474 = vpack.c.b16 %v471, %v470
    %v475 = vpack.c.b16 %v473, %v472
    %v479 = vsel %vm93, %v465, 0
    %481 = vmatprep.subr.bf16.mxu0 0
    %482 = vmatpush1.bf16.msra.mxu0 %v474
    %483 = vmatprep.subr.bf16.mxu0 0
    %484 = vmatpush1.bf16.msra.mxu0 %v475
    %485 = vmatprep.subr.bf16.mxu0 0
    %486 = vmatpush1.bf16.msra.mxu0 0
    %487 = vmatprep.subr.bf16.mxu0 0
    %488 = vmatpush1.bf16.msra.mxu0 0
    %489 = vmatprep.subr.bf16.mxu0 0
    %490 = vmatpush1.bf16.msra.mxu0 0
    %491 = vmatprep.subr.bf16.mxu0 0
    %492 = vmatpush1.bf16.msra.mxu0 0
    %493 = vmatprep.subr.bf16.mxu0 0
    %494 = vmatpush1.bf16.msra.mxu0 0
    %495 = vmatprep.subr.bf16.mxu0 0
    %496 = vmatpush1.bf16.msra.mxu0 0
    %497 = vmatprep.subr.bf16.mxu0 0
    %498 = vmatpush1.bf16.msra.mxu0 0
    %499 = vmatprep.subr.bf16.mxu0 0
    %500 = vmatpush1.bf16.msra.mxu0 0
    %501 = vmatprep.subr.bf16.mxu0 0
    %502 = vmatpush1.bf16.msra.mxu0 0
    %503 = vmatprep.subr.bf16.mxu0 0
    %504 = vmatpush1.bf16.msra.mxu0 0
    %505 = vmatprep.subr.bf16.mxu0 0
    %506 = vmatpush1.bf16.msra.mxu0 0
    %507 = vmatprep.subr.bf16.mxu0 0
    %508 = vmatpush1.bf16.msra.mxu0 0
    %509 = vmatprep.subr.bf16.mxu0 0
    %510 = vmatpush1.bf16.msra.mxu0 0
    %511 = vmatprep.subr.bf16.mxu0 0
    %512 = vmatpush1.bf16.msra.mxu0 0
    %513 = vmatprep.mubr.bf16.mxu0 0
    %514 = vmatmul.mubr.bf16.gmra.mrb[0].mxu0 %v479
    %v515 = vpop.f32.mrb[0].mxu0
    %v516 = vadd.f32 %v458, %v515
    %v517 = vpop.f32.mrb[0].mxu0
    %v518 = vpop.f32.mrb[0].mxu0
    %v519 = vpop.f32.mrb[0].mxu0
    %520 = vdwg.mxu0
    %521 = vst [vmem:[#allocation8] sm:$0x3] %v516
    // Predicated region
    $region30: #{bert_cnn_forward.1} parent=1 // pred_check
      _
    $region31: #{bert_cnn_forward.1} parent=1 // pred_check_branch
      %523 = sbr.rel (0) target = $region33
    $region32: #{bert_cnn_forward.1} parent=1 // pred_region
      %s525 = ssub.s32 32, 32
      %526 = vsyncadd [#allocation4], %s525
      %s528 = sshll.u32 [#allocation8], 4
      %s529 = int_to_ptr.vmem [resolvable:$true] %s528
      %531 = dma.vmem_to_hbm [thread:$0]  %s529, 32, %s4, [#allocation4]
    $region33: #{bert_cnn_forward.1} parent=1 // pred_fallthru
      _
    // Predicated region
    $region34: #{bert_cnn_forward.1} parent=1 // pred_check
      _
    $region35: #{bert_cnn_forward.1} parent=1 // pred_check_branch
      %533 = sbr.rel (0) target = $region37
    $region36: #{bert_cnn_forward.1} parent=1 // pred_region
      %534 = dma.done [#allocation4], 32
    $region37: #{bert_cnn_forward.1} parent=1 // pred_fallthru
      _
    %535 = vsyncpa [#allocation3], 1
    %536 = vsyncpa [#allocation6], 1
    %537 = vsyncpa [#allocation4], 1

</llo_original>
